<compile_context>
chip_gen: v5e
topology: v5e:2x2
jax: 0.10.0
libtpu: 0.0.40
codegen_flags: <defaults>
</compile_context>

<pallas_src>
import jax
import jax.numpy as jnp
from jax import lax
from jax.experimental import pallas as pl
from jax.experimental.pallas import tpu as pltpu

_EPS = 1e-9


# --------------------------------------------------------------------------
# Standalone Squash kernel (the PyTorch `Squash` module, x: (B, num_caps, dim))
# --------------------------------------------------------------------------
def _squash_kernel(x_ref, o_ref):
    x = x_ref[...]                                            # (rows, vec_dim)
    sq = jnp.sum(x * x, axis=-1, keepdims=True)
    # factor = sq / ((1+sq)*sqrt(sq)) == sq * rsqrt(sq) / (1+sq)   (rsqrt -> EUP)
    # eps keeps zero vectors at 0 instead of NaN (review correctness note).
    o_ref[...] = x * (sq * lax.rsqrt(sq + _EPS) / (1.0 + sq))


def squash_pallas(x, *, row_tile=512):
    """PyTorch `Squash` forward. x: (batch, num_caps, vec_dim)."""
    x = jnp.asarray(x, jnp.float32)
    B, C, Dv = x.shape
    R = B * C
    xf = x.reshape(R, Dv)                 # flatten: every row is one capsule vector
    tr = R if R <= row_tile else row_tile  # one block, or >=512-row tiles
    out = pl.pallas_call(
        _squash_kernel,
        out_shape=jax.ShapeDtypeStruct((R, Dv), jnp.float32),
        grid=(pl.cdiv(R, tr),),
        in_specs=[pl.BlockSpec((tr, Dv), lambda r: (r, 0))],
        out_specs=pl.BlockSpec((tr, Dv), lambda r: (r, 0)),
        compiler_params=pltpu.CompilerParams(dimension_semantics=("parallel",)),
    )(xf)
    return out.reshape(B, C, Dv)


# --------------------------------------------------------------------------
# Fused CapsuleLayer kernel: conv matmul -> squash -> folded projection+voting
# -> squashed capsule lengths, all in VMEM, one dense (TB, J) store per step.
# --------------------------------------------------------------------------
def _make_fused_capsule_kernel(*, HW):
    def kernel(p_ref, w_ref, b_ref, wf_ref, grp_ref, grp2_ref, o_ref):
        # p_ref   : (HW, TB, K)     bf16   im2col patches (window-major, TB samples)
        # w_ref   : (K, Cout)       bf16   conv weight (resident)
        # b_ref   : (1, Cout)       f32    conv bias
        # wf_ref  : (HW, Cout, J*D) bf16   voting-folded projection weights
        # grp_ref : (Cout, Cout)    f32    block-ones (capsule groups of D channels)
        # grp2_ref: (J*D, J)        f32    block-ones (SAR capsule groups)
        # o_ref   : (TB, J)         f32    per-SAR-capsule squashed lengths
        f32 = jnp.float32
        w = w_ref[...]
        b = b_ref[...]
        grp = grp_ref[...]

        s = None
        for hw in range(HW):                        # static unroll; HW is small
            # (1) Conv2d for window hw: one (TB, K) @ (K, Cout) MXU matmul + bias.
            ph = p_ref[hw]                          # first-axis ref slice, no relayout
            conv = jnp.dot(ph, w, preferred_element_type=f32) + b
            # (2) Squash(u_tilda): block-ones matmul broadcasts each capsule's
            #     squared norm over its D channels (no in-kernel reshape).
            sq = jnp.dot(conv * conv, grp, preferred_element_type=f32)
            u = conv * (sq * lax.rsqrt(sq + _EPS) / (1.0 + sq))
            # (3) Projection + voting, accumulated over windows (review option (a)).
            part = jnp.dot(u.astype(jnp.bfloat16), wf_ref[hw],
                           preferred_element_type=f32)           # (TB, J*D)
            s = part if s is None else s + part
        # (4) ||Squash(s_j)|| == ||s_j||^2 / (1 + ||s_j||^2); per-j squared norms
        #     via another block-ones matmul -> dense (TB, J) store.
        sq2 = jnp.dot(s * s, grp2_ref[...], preferred_element_type=f32)
        o_ref[...] = sq2 / (1.0 + sq2)

    return kernel


def prepare_capsule_params(conv_w, conv_b, prim_w, vote_w, *, input_dim, Ho, Wo):
    """One-time parameter-side reshapes / folds (hoisted out of the forward)."""
    Cout, Cin, kh, kw = conv_w.shape
    D = input_dim
    assert Cout % D == 0, "num_out_channel must be divisible by input_dim"
    G = Cout // D
    HW = Ho * Wo
    P, JD, D2 = prim_w.shape
    assert D2 == D and JD % D == 0 and P == G * HW
    J = JD // D

    # conv weight/bias, MXU-ready; weights bf16 (review), bias stays f32.
    w2 = jnp.asarray(conv_w, jnp.float32).reshape(Cout, Cin * kh * kw).T
    w2 = w2.astype(jnp.bfloat16)                                       # (K, Cout)
    b2 = jnp.asarray(conv_b, jnp.float32).reshape(1, Cout)

    # voting weights folded into projection weights: wfold[hw, g*D+e, j*D+dout]
    vw = jnp.asarray(vote_w, jnp.float32)[:, 0, :, 0]                  # (J, P)
    pw = jnp.asarray(prim_w, jnp.float32).reshape(P, J, D, D)          # [p, j, dout, e]
    fold = (pw * vw.T[:, :, None, None]).transpose(0, 3, 1, 2)         # [p, e, j, dout]
    wfold = (fold.reshape(G, HW, D, J, D)        # reference p = g*HW + hw
                 .transpose(1, 0, 2, 3, 4)       # [hw, g, e, j, dout]
                 .reshape(HW, G * D, J * D)
                 .astype(jnp.bfloat16))

    # block-ones "group" matrices, precomputed once (review: hoist out of kernel).
    c = jnp.arange(Cout)
    grp = (c[:, None] // D == c[None, :] // D).astype(jnp.float32)     # (Cout, Cout)
    grp2 = ((jnp.arange(J * D)[:, None] // D) ==
            jnp.arange(J)[None, :]).astype(jnp.float32)                # (J*D, J)

    meta = dict(G=G, D=D, J=J, HW=HW, Ho=Ho, Wo=Wo, Cout=Cout)
    return w2, b2, wfold, grp, grp2, meta


def _pick_batch_tile(N, HW):
    """Batch tile: fill MXU rows, keep >=2 grid steps when the batch allows it
    (v7x megacore), and keep the (TB, J) output block (8,128)-legal
    (TB % 8 == 0 or TB == N)."""
    tb = min(N, max(8, pl.cdiv(128, HW)))      # aim for >=128-ish rows of work
    if N >= 16 and tb > N // 2:                # leave >=2 steps for megacore sharding
        tb = N // 2
    if tb % 8 != 0:
        tb = N if tb >= N else max(8, (tb // 8) * 8)
    return max(1, min(tb, N))


def capsule_layer_forward(x, prepared, *, kernel_size, stride, batch_tile=None):
    w2, b2, wfold, grp, grp2, meta = prepared
    D, J, HW = meta["D"], meta["J"], meta["HW"]
    Ho, Wo, Cout = meta["Ho"], meta["Wo"], meta["Cout"]
    N, Cin, H, W = x.shape
    kh = kw = kernel_size
    # TODO(synk): general stride (< kernel_size, overlapping windows) needs in-kernel
    # patch extraction via a grid/index_map; only stride == kernel_size is handled.
    assert stride == kernel_size and H // kh == Ho and W // kw == Wo
    K = Cin * kh * kw

    # stride == kernel -> non-overlapping patches: im2col is ONE reshape/transpose,
    # laid out window-major (HW, N, K) so the kernel slices windows on the ref's
    # first axis.  bf16 halves the activation DMA; matmuls accumulate in f32.
    # TODO(synk): for large H/W/Cin, fuse this transpose into the pallas_call
    # (allow_input_fusion) or gather patches in-kernel to avoid the HBM copy.
    patches = (jnp.asarray(x, jnp.float32)
               .reshape(N, Cin, Ho, kh, Wo, kw)
               .transpose(2, 4, 0, 1, 3, 5)          # (Ho, Wo, N, Cin, kh, kw)
               .reshape(HW, N, K)
               .astype(jnp.bfloat16))

    TB = batch_tile if batch_tile is not None else _pick_batch_tile(N, HW)
    kernel = _make_fused_capsule_kernel(HW=HW)
    out = pl.pallas_call(
        kernel,
        out_shape=jax.ShapeDtypeStruct((N, J), jnp.float32),
        grid=(pl.cdiv(N, TB),),
        in_specs=[
            pl.BlockSpec((HW, TB, K), lambda n: (0, n, 0)),        # per-step patches
            pl.BlockSpec((K, Cout), lambda n: (0, 0)),             # conv weight (resident)
            pl.BlockSpec((1, Cout), lambda n: (0, 0)),             # conv bias
            pl.BlockSpec((HW, Cout, J * D), lambda n: (0, 0, 0)),  # folded proj+vote weight
            pl.BlockSpec((Cout, Cout), lambda n: (0, 0)),          # capsule-group ones
            pl.BlockSpec((J * D, J), lambda n: (0, 0)),            # SAR-group ones
        ],
        out_specs=pl.BlockSpec((TB, J), lambda n: (n, 0)),         # dense (TB, J) slab
        compiler_params=pltpu.CompilerParams(
            dimension_semantics=("parallel",),                     # v7x: both TCs
            vmem_limit_bytes=32 * 1024 * 1024,
        ),
    )(patches, w2, b2, wfold, grp, grp2)
    return out


# --------------------------------------------------------------------------
# Pure-JAX references (correctness check)
# --------------------------------------------------------------------------
def _squash_ref(v):
    sq = jnp.sum(v * v, axis=-1, keepdims=True)
    l2 = jnp.sqrt(sq)
    return (sq / ((1.0 + sq) * l2)) * v


def reference_forward(x, params, *, stride, input_dim):
    conv_w, conv_b, prim_w, vote_w = params
    out = jax.lax.conv_general_dilated(
        x, conv_w, (stride, stride), "VALID",
        dimension_numbers=("NCHW", "OIHW", "NCHW"),
    ) + conv_b[None, :, None, None]
    N, C, H, W = out.shape
    D = input_dim
    G = C // D
    u_tilda = out.reshape(N, G, D, H, W).transpose(0, 1, 3, 4, 2).reshape(N, -1, D)
    u = _squash_ref(u_tilda)
    P = u.shape[1]
    u_hat = jnp.einsum("npe,pfe->npf", u, prim_w).reshape(N, P, vote_w.shape[0], D)
    vw = vote_w[:, 0, :, 0]                                   # (J, P)
    s = jnp.einsum("npjd,jp->njd", u_hat, vw)
    v = _squash_ref(s)
    return jnp.sqrt(jnp.sum(v * v, axis=-1))


# --------------------------------------------------------------------------
if __name__ == "__main__":
    key = jax.random.PRNGKey(0)
    ks = jax.random.split(key, 8)

    # ---- Squash module (the spec): x (batch=2, num_caps=8, vec_dim=8) ----
    xs = jax.random.normal(ks[5], (2, 8, 8), jnp.float32)
    sq_out = jax.block_until_ready(squash_pallas(xs))
    assert bool(jnp.allclose(sq_out, _squash_ref(xs), rtol=2e-3, atol=1e-6)), "squash mismatch"

    # Tiled path (>512 rows, ragged last tile).
    xl = jax.random.normal(ks[6], (4, 300, 16), jnp.float32)
    sq_out_l = jax.block_until_ready(squash_pallas(xl))
    assert bool(jnp.allclose(sq_out_l, _squash_ref(xl), rtol=2e-3, atol=1e-6)), "squash (tiled) mismatch"

    # ---- fused capsule-layer forward (one pallas_call, batch-tiled grid) ----
    # CapsuleLayer(num_in_channel=4, num_out_channel=16, kernel_size=8, stride=8,
    #              num_primary_cap=8, num_sar_cap=4, input_dim=8), batch 16.
    N, Cin, Hin, Win = 16, 4, 16, 16
    Cout, ksz, stride = 16, 8, 8
    D, J = 8, 4
    Ho = (Hin - ksz) // stride + 1
    Wo = (Win - ksz) // stride + 1
    P = (Cout // D) * Ho * Wo

    x = jax.random.normal(ks[0], (N, Cin, Hin, Win), jnp.float32)
    conv_w = jax.random.normal(ks[1], (Cout, Cin, ksz, ksz), jnp.float32) * 0.05
    conv_b = jax.random.normal(ks[2], (Cout,), jnp.float32) * 0.05
    prim_w = jax.random.normal(ks[3], (P, J * D, D), jnp.float32) * 0.1   # PrimaryCapsule weights
    vote_w = jax.random.normal(ks[4], (J, 1, P, 1), jnp.float32) * 0.1    # VotingCapLayer weight

    prepared = prepare_capsule_params(conv_w, conv_b, prim_w, vote_w,
                                      input_dim=D, Ho=Ho, Wo=Wo)
    out = jax.block_until_ready(
        capsule_layer_forward(x, prepared, kernel_size=ksz, stride=stride))
    ref = reference_forward(x, (conv_w, conv_b, prim_w, vote_w),
                            stride=stride, input_dim=D)
    assert out.shape == (N, J)
    # bf16-weight MXU path -> slightly looser tolerance than the pure-f32 version.
    assert bool(jnp.allclose(out, ref, rtol=2e-2, atol=5e-4)), (out, ref)

    print("KERNEL_OK")
</pallas_src>

<mosaic_0001>
module attributes {stable_mosaic.version = 11 : i64} {
  func.func @_squash_kernel(%arg0: i32, %arg1: memref<16x8xf32, #tpu.memory_space<vmem>>, %arg2: memref<16x8xf32, #tpu.memory_space<vmem>>) attributes {dimension_semantics = [#tpu.dimension_semantics<parallel>], iteration_bounds = array<i64: 1>, scalar_prefetch = 0 : i64, scratch_operands = 0 : i64, tpu.core_type = #tpu.core_type<tc>, window_params = [{transform_indices = @transform_0, window_bounds = array<i64: 16, 8>}, {transform_indices = @transform_1, window_bounds = array<i64: 16, 8>}]} {
    %c0 = arith.constant 0 : index
    %c0_0 = arith.constant 0 : index
    %0 = vector.load %arg1[%c0, %c0_0] : memref<16x8xf32, #tpu.memory_space<vmem>>, vector<16x8xf32>
    %1 = arith.mulf %0, %0 : vector<16x8xf32>
    %cst = arith.constant dense<0.000000e+00> : vector<16xf32>
    %2 = vector.multi_reduction <add>, %1, %cst [1] : vector<16x8xf32> to vector<16xf32>
    %3 = vector.shape_cast %2 : vector<16xf32> to vector<16x1xf32>
    %cst_1 = arith.constant 9.99999971E-10 : f32
    %4 = vector.broadcast %cst_1 : f32 to vector<16x1xf32>
    %5 = arith.addf %3, %4 : vector<16x1xf32>
    %6 = math.rsqrt %5 : vector<16x1xf32>
    %7 = arith.mulf %3, %6 : vector<16x1xf32>
    %cst_2 = arith.constant 1.000000e+00 : f32
    %8 = vector.broadcast %cst_2 : f32 to vector<16x1xf32>
    %9 = arith.addf %8, %3 : vector<16x1xf32>
    %10 = arith.divf %7, %9 : vector<16x1xf32>
    %11 = vector.broadcast %10 : vector<16x1xf32> to vector<16x8xf32>
    %12 = arith.mulf %0, %11 : vector<16x8xf32>
    %c0_3 = arith.constant 0 : index
    %c0_4 = arith.constant 0 : index
    %13 = vector.load %arg2[%c0_3, %c0_4] : memref<16x8xf32, #tpu.memory_space<vmem>>, vector<16x8xf32>
    tpu.vector_store %arg2[%c0_3, %c0_4], %12 {strides = array<i32>} : memref<16x8xf32, #tpu.memory_space<vmem>>, vector<16x8xf32>,
    return
  }
  func.func @transform_0(%arg0: i32) -> (i32, i32) {
    %c0_i32 = arith.constant 0 : i32
    %c0_i32_0 = arith.constant 0 : i32
    return %arg0, %c0_i32 : i32, i32
  }
  func.func @transform_1(%arg0: i32) -> (i32, i32) {
    %c0_i32 = arith.constant 0 : i32
    %c0_i32_0 = arith.constant 0 : i32
    return %arg0, %c0_i32 : i32, i32
  }
}

</mosaic_0001>

<llo_original>
// kernel: tpu_custom_call.1
$region0: #{tpu_custom_call.1}
  #allocation0 [shape = 'u32[]', space=smem, size = 0x4, offset = 0x4, fixed_abs, tag = 'smem constant byte address 0x4 - core index']
  #allocation1 [shape = 'u32[72,128]{1,0:T(1,128)}', space=vmem, size = 0x9000, scoped, tag = 'internal scratch']
  %s0 = inlined_call_operand.vmem [shape: f32[16,8], index: 0, kind: input, shape index: {}]
  %s1 = inlined_call_operand.vmem [shape: f32[16,8], index: 1, kind: output, shape index: {}]
  %s2 = sld [smem:[#allocation0]]
  $region14: #{tpu_custom_call.1} parent=0
    _
  %s4 = ssub.s32 1, %s2
  %s5 = scalar_select 0, %s4, %s2
  // Predicated region
  $region2: #{tpu_custom_call.1} parent=0 // pred_check
    _
  $region3: #{tpu_custom_call.1} parent=0 // pred_check_branch
    %7 = sbr.rel (0) target = $region5
  $region4: #{tpu_custom_call.1} parent=0 // pred_region
    _
  $region5: #{tpu_custom_call.1} parent=0 // pred_fallthru
    _
  %v8 = vld [vmem:[%s0] sm:$0xff]
  %v9 = vld [vmem:[%s0 + $0x8] sm:$0xff]
  %v10 = vmul.f32 %v8, %v8
  %v11 = vmul.f32 %v9, %v9
  %vm12 = vcmask 64512
  %v13 = vsel %vm12, %v10, 0.0
  %14 = vadd.xlane.f32.xlu0 %v13
  %v15 = vpop.xlane.xlu0 %14
  %v16 = vsel %vm12, %v11, 0.0
  %17 = vadd.xlane.f32.xlu0 %v16
  %v18 = vpop.xlane.xlu0 %17
  %v19 = vadd.f32 %v15, 1e-09
  %v20 = vadd.f32 %v18, 1e-09
  %v21 = vrsqrt.pop %v19
  %v22 = vmul.f32 %v21, %v19
  %v23 = vmul.f32 %v22, %v21
  %v24 = vmul.f32 0.5, %v23
  %v25 = vsub.f32 1.5, %v24
  %v26 = vmul.f32 %v21, %v25
  %vm27 = vweird.f32 %v19
  %vm28 = vweird.f32 %v21
  %vm29 = vmor %vm27, %vm28
  %v30 = vsel %vm29, %v21, %v26
  %v31 = vrsqrt.pop %v20
  %v32 = vmul.f32 %v31, %v20
  %v33 = vmul.f32 %v32, %v31
  %v34 = vmul.f32 0.5, %v33
  %v35 = vsub.f32 1.5, %v34
  %v36 = vmul.f32 %v31, %v35
  %vm37 = vweird.f32 %v20
  %vm38 = vweird.f32 %v31
  %vm39 = vmor %vm37, %vm38
  %v40 = vsel %vm39, %v31, %v36
  %v41 = vmul.f32 %v15, %v30
  %v42 = vmul.f32 %v18, %v40
  %v43 = vadd.f32 %v15, 1.0
  %v44 = vadd.f32 %v18, 1.0
  %v45 = vrcp.pop %v43
  %v46 = vmul.f32 %v43, %v45
  %v47 = vsub.f32 1.0, %v46
  %v48 = vmul.f32 %v45, %v47
  %v49 = vadd.f32 %v45, %v48
  %vm50 = vweird.f32 %v43
  %vm51 = vweird.f32 %v45
  %vm52 = vmor %vm50, %vm51
  %v53 = vsel %vm52, %v45, %v49
  %v54 = vand.u32 2147483647, %v43
  %vm55 = vcmp.eq.f32.partialorder %v54, 8.507059e+37
  %v56 = vand.u32 %v43, 2147483648
  %v57 = vor.u32 1.1754944e-38, %v56
  %v58 = vsel %vm55, %v57, %v53
  %v59 = vmul.f32 %v41, %v58
  %v60 = vrcp.pop %v44
  %v61 = vmul.f32 %v44, %v60
  %v62 = vsub.f32 1.0, %v61
  %v63 = vmul.f32 %v60, %v62
  %v64 = vadd.f32 %v60, %v63
  %vm65 = vweird.f32 %v44
  %vm66 = vweird.f32 %v60
  %vm67 = vmor %vm65, %vm66
  %v68 = vsel %vm67, %v60, %v64
  %v69 = vand.u32 2147483647, %v44
  %vm70 = vcmp.eq.f32.partialorder %v69, 8.507059e+37
  %v71 = vand.u32 %v44, 2147483648
  %v72 = vor.u32 1.1754944e-38, %v71
  %v73 = vsel %vm70, %v72, %v68
  %v74 = vmul.f32 %v42, %v73
  %v75 = vmul.f32 %v8, %v59
  %v76 = vmul.f32 %v9, %v74
  %77 = vst.msk [vmem:[%s1] sm:$0xff] %vm12, %v75
  %78 = vst.msk [vmem:[%s1 + $0x8] sm:$0xff] %vm12, %v76
  // Predicated region
  $region6: #{tpu_custom_call.1} parent=0 // pred_check
    _
  $region7: #{tpu_custom_call.1} parent=0 // pred_check_branch
    %80 = sbr.rel (0) target = $region9
  $region8: #{tpu_custom_call.1} parent=0 // pred_region
    _
  $region9: #{tpu_custom_call.1} parent=0 // pred_fallthru
    _
  // Predicated region
  $region10: #{tpu_custom_call.1} parent=0 // pred_check
    _
  $region11: #{tpu_custom_call.1} parent=0 // pred_check_branch
    %82 = sbr.rel (0) target = $region13
  $region12: #{tpu_custom_call.1} parent=0 // pred_region
    _
  $region13: #{tpu_custom_call.1} parent=0 // pred_fallthru
    _

</llo_original>
